<compile_context>
chip_gen: v7x
topology: tpu7x:2x2x1
jax: 0.10.0
libtpu: 0.0.40
codegen_flags: <defaults>
</compile_context>

<pallas_src>
import functools

import jax
import jax.numpy as jnp
from jax.experimental import pallas as pl
from jax.experimental.pallas import tpu as pltpu


def _round_up(n, m):
    return ((n + m - 1) // m) * m


# --------------------------------------------------------------------------
# Kernel: one batch tile, all layers fused.
# --------------------------------------------------------------------------
def _speaker_kernel(x_ref,                      # (TB, Fp)      matmul dtype
                    wa_ref, ba_ref,             # fused [layer1*bn1 | skip]
                    w2_ref, b2_ref,             # layer2 with bn2 folded
                    w3_ref, b3_ref,             # layer3
                    out_ref,                    # (TB, Np) f32
                    *, hp):
    cdt = wa_ref.dtype                          # matmul input dtype (bf16)
    x = x_ref[...]

    # Fused layer1(+bn1) and skip matmul (shared LHS), f32 accumulate,
    # folded bias/shift add, ReLU on both halves -> epilogue entirely in f32.
    y = jnp.dot(x, wa_ref[...], preferred_element_type=jnp.float32) + ba_ref[...]
    y = jnp.maximum(y, 0.0)
    h1 = y[:, :hp]                              # main branch (bn1 + relu), lane-aligned slice
    sk = y[:, hp:]                              # skip branch (relu)
    # dropout(p=0.3) in eval mode -> identity

    # layer2 (+ folded bn2) + relu
    h2 = jnp.dot(h1.astype(cdt), w2_ref[...],
                 preferred_element_type=jnp.float32) + b2_ref[...]
    h2 = jnp.maximum(h2, 0.0)

    comb = h2 + sk
    # dropout in eval mode -> identity

    out = jnp.dot(comb.astype(cdt), w3_ref[...],
                  preferred_element_type=jnp.float32) + b3_ref[...]
    out_ref[...] = out.astype(out_ref.dtype)


# --------------------------------------------------------------------------
# Wrapper-side folding / fusing / padding of the parameters.
# --------------------------------------------------------------------------
def fold_and_pad_params(p, *, input_size, hidden_size, num_speakers, matmul_dtype):
    h2 = hidden_size // 2
    fp = _round_up(input_size, 128)
    hp = _round_up(hidden_size, 128)
    h2p = _round_up(h2, 128)
    np_ = _round_up(num_speakers, 128)

    # Fold eval-mode BatchNorm + bias into the preceding Linear weight:
    #   (x@W + b)*scale + shift == x @ (W*scale) + (b*scale + shift)
    w1f = p["w1"] * p["bn1_scale"]                      # (F, H) column-scaled
    s1f = p["b1"] * p["bn1_scale"] + p["bn1_shift"]     # (1, H)
    w2f = p["w2"] * p["bn2_scale"]                      # (H, H/2)
    s2f = p["b2"] * p["bn2_scale"] + p["bn2_shift"]     # (1, H/2)

    # Horizontally fuse layer1' and skip (they share the LHS x) and zero-pad
    # everything to lane-dense (multiple-of-128) shapes.  Padded rows/cols are
    # zero, so the extra lanes carry exact zeros through relu/add/matmul.
    wa = jnp.zeros((fp, hp + h2p), jnp.float32)
    wa = wa.at[:input_size, :hidden_size].set(w1f)
    wa = wa.at[:input_size, hp:hp + h2].set(p["ws"])
    ba = jnp.zeros((1, hp + h2p), jnp.float32)
    ba = ba.at[:, :hidden_size].set(s1f)
    ba = ba.at[:, hp:hp + h2].set(p["bs"])

    w2p = jnp.zeros((hp, h2p), jnp.float32).at[:hidden_size, :h2].set(w2f)
    b2p = jnp.zeros((1, h2p), jnp.float32).at[:, :h2].set(s2f)
    w3p = jnp.zeros((h2p, np_), jnp.float32).at[:h2, :num_speakers].set(p["w3"])
    b3p = jnp.zeros((1, np_), jnp.float32).at[:, :num_speakers].set(p["b3"])

    return dict(
        wa=wa.astype(matmul_dtype), ba=ba,          # biases/shifts stay f32
        w2=w2p.astype(matmul_dtype), b2=b2p,
        w3=w3p.astype(matmul_dtype), b3=b3p,
        dims=(fp, hp, h2p, np_),
    )


@functools.partial(
    jax.jit,
    static_argnames=("input_size", "hidden_size", "num_speakers",
                     "matmul_dtype", "batch_tile"))
def speaker_recognition_forward(x, params, *, input_size, hidden_size,
                                num_speakers, matmul_dtype=jnp.bfloat16,
                                batch_tile=512):
    """Full SpeakerRecognitionModel forward in one batch-tiled Pallas kernel."""
    fused = fold_and_pad_params(
        params, input_size=input_size, hidden_size=hidden_size,
        num_speakers=num_speakers, matmul_dtype=matmul_dtype)
    fp, hp, h2p, np_ = fused["dims"]

    B = x.shape[0]
    # Batch tile: multiple of 8 sublanes, capped by batch_tile.  VMEM use is
    # tiny here (x tile + out tile + resident padded weights << 32 MiB), so
    # this is safe even on v7x's 64 MiB physical VMEM.
    tb = min(batch_tile, _round_up(B, 8))
    bp = _round_up(B, tb)

    # Zero-pad x to (Bp, Fp) and cast to the matmul dtype (padding is exact
    # zeros, so it contributes nothing to the dot products).
    xp = jnp.zeros((bp, fp), jnp.float32).at[:B, :input_size].set(x)
    xp = xp.astype(matmul_dtype)

    def resident(shape):
        # Weights/biases: constant block index -> stay VMEM-resident over grid.
        return pl.BlockSpec(shape, lambda i: (0, 0))

    grid = (bp // tb,)
    out_padded = pl.pallas_call(
        functools.partial(_speaker_kernel, hp=hp),
        out_shape=jax.ShapeDtypeStruct((bp, np_), jnp.float32),
        grid=grid,
        in_specs=[
            pl.BlockSpec((tb, fp), lambda i: (i, 0)),      # x tile
            resident((fp, hp + h2p)), resident((1, hp + h2p)),
            resident((hp, h2p)),      resident((1, h2p)),
            resident((h2p, np_)),     resident((1, np_)),
        ],
        out_specs=pl.BlockSpec((tb, np_), lambda i: (i, 0)),
        compiler_params=pltpu.CompilerParams(
            dimension_semantics=("parallel",),             # megacore-friendly
            vmem_limit_bytes=48 << 20),                    # < v7x 64 MiB VMEM
    )(xp, fused["wa"], fused["ba"], fused["w2"], fused["b2"],
      fused["w3"], fused["b3"])

    return out_padded[:B, :num_speakers]


# --------------------------------------------------------------------------
# Parameter init + references.
# --------------------------------------------------------------------------
def init_params(key, input_size, hidden_size, num_speakers):
    """Deterministic synthetic parameter init (matching PyTorch layer shapes)."""
    ks = jax.random.split(key, 12)
    h2 = hidden_size // 2
    eps = 1e-5

    def lin(kw, kb, fan_in, fan_out):
        # PyTorch Linear weight is (out, in); we store it transposed (in, out).
        bound = 1.0 / jnp.sqrt(fan_in)
        w = jax.random.uniform(kw, (fan_in, fan_out), jnp.float32, -bound, bound)
        b = jax.random.uniform(kb, (1, fan_out), jnp.float32, -bound, bound)
        return w, b

    w1, b1 = lin(ks[0], ks[1], input_size, hidden_size)
    w2, b2 = lin(ks[2], ks[3], hidden_size, h2)
    ws, bs = lin(ks[4], ks[5], input_size, h2)
    w3, b3 = lin(ks[6], ks[7], h2, num_speakers)

    # BatchNorm1d (eval mode) gamma/beta + running stats, pre-folded to
    # scale/shift:  y = gamma*(x - mean)/sqrt(var+eps) + beta = x*scale + shift
    def bn(kg, km, n):
        gamma = 1.0 + 0.1 * jax.random.normal(kg, (1, n), jnp.float32)
        beta = 0.05 * jax.random.normal(jax.random.fold_in(kg, 1), (1, n), jnp.float32)
        mean = 0.1 * jax.random.normal(km, (1, n), jnp.float32)
        var = 1.0 + 0.1 * jnp.abs(
            jax.random.normal(jax.random.fold_in(km, 1), (1, n), jnp.float32))
        scale = gamma / jnp.sqrt(var + eps)
        shift = beta - mean * scale
        return scale, shift

    bn1_scale, bn1_shift = bn(ks[8], ks[9], hidden_size)
    bn2_scale, bn2_shift = bn(ks[10], ks[11], h2)

    return dict(
        w1=w1, b1=b1, bn1_scale=bn1_scale, bn1_shift=bn1_shift,
        w2=w2, b2=b2, bn2_scale=bn2_scale, bn2_shift=bn2_shift,
        ws=ws, bs=bs, w3=w3, b3=b3,
    )


def reference_forward(x, p):
    """Pure-JAX float32 reference (original module math, eval mode)."""
    h1 = jnp.maximum((x @ p["w1"] + p["b1"]) * p["bn1_scale"] + p["bn1_shift"], 0.0)
    h2 = jnp.maximum((h1 @ p["w2"] + p["b2"]) * p["bn2_scale"] + p["bn2_shift"], 0.0)
    sk = jnp.maximum(x @ p["ws"] + p["bs"], 0.0)
    return (h2 + sk) @ p["w3"] + p["b3"]


def reference_forward_matched(x, p, *, input_size, hidden_size, num_speakers,
                              matmul_dtype):
    """Pure-JAX reference with the SAME folding/padding/bf16 casts as the kernel."""
    fused = fold_and_pad_params(
        p, input_size=input_size, hidden_size=hidden_size,
        num_speakers=num_speakers, matmul_dtype=matmul_dtype)
    fp, hp, h2p, np_ = fused["dims"]
    B = x.shape[0]
    xp = jnp.zeros((B, fp), jnp.float32).at[:, :input_size].set(x).astype(matmul_dtype)
    y = jnp.maximum(
        jnp.dot(xp, fused["wa"], preferred_element_type=jnp.float32) + fused["ba"], 0.0)
    h1, sk = y[:, :hp], y[:, hp:]
    h2 = jnp.maximum(
        jnp.dot(h1.astype(matmul_dtype), fused["w2"],
                preferred_element_type=jnp.float32) + fused["b2"], 0.0)
    out = jnp.dot((h2 + sk).astype(matmul_dtype), fused["w3"],
                  preferred_element_type=jnp.float32) + fused["b3"]
    return out[:, :num_speakers]


if __name__ == "__main__":
    # Shapes consistent with the module/script:
    #   input_size = 66  (32 MFCC means + 32 MFCC stds + 1 spectral centroid
    #                     + 1 zero-crossing rate)
    #   hidden_size = 128 (SpeakerIdentifier builds the model with hidden 128)
    batch = 4
    input_size = 66
    hidden_size = 128
    num_speakers = 8

    key = jax.random.PRNGKey(0)
    k_x, k_p = jax.random.split(key)
    x = jax.random.normal(k_x, (batch, input_size), jnp.float32)
    params = init_params(k_p, input_size, hidden_size, num_speakers)

    out = speaker_recognition_forward(
        x, params, input_size=input_size, hidden_size=hidden_size,
        num_speakers=num_speakers)
    out = jax.block_until_ready(out)
    assert out.shape == (batch, num_speakers)

    # Tight check against a pure-JAX reference that uses the same bf16
    # matmul-input casts / f32 accumulation as the kernel.
    ref_matched = reference_forward_matched(
        x, params, input_size=input_size, hidden_size=hidden_size,
        num_speakers=num_speakers, matmul_dtype=jnp.bfloat16)
    assert jnp.allclose(out, ref_matched, atol=2e-3, rtol=2e-3), \
        "mismatch vs dtype-matched reference"

    # Looser check against the full-f32 original-module math (bf16 inputs).
    ref_f32 = reference_forward(x, params)
    assert jnp.allclose(out, ref_f32, atol=5e-2, rtol=5e-2), \
        "mismatch vs f32 reference"

    print("KERNEL_OK")
</pallas_src>

<mosaic_0001>
module attributes {stable_mosaic.version = 11 : i64} {
  func.func @_speaker_kernel(%arg0: i32, %arg1: memref<8x128xbf16, #tpu.memory_space<vmem>>, %arg2: memref<128x256xbf16, #tpu.memory_space<vmem>>, %arg3: memref<1x256xf32, #tpu.memory_space<vmem>>, %arg4: memref<128x128xbf16, #tpu.memory_space<vmem>>, %arg5: memref<1x128xf32, #tpu.memory_space<vmem>>, %arg6: memref<128x128xbf16, #tpu.memory_space<vmem>>, %arg7: memref<1x128xf32, #tpu.memory_space<vmem>>, %arg8: memref<8x128xf32, #tpu.memory_space<vmem>>) attributes {dimension_semantics = [#tpu.dimension_semantics<parallel>], iteration_bounds = array<i64: 1>, scalar_prefetch = 0 : i64, scratch_operands = 0 : i64, tpu.core_type = #tpu.core_type<tc>, window_params = [{transform_indices = @transform_0, window_bounds = array<i64: 8, 128>}, {pipeline_mode = #tpu.pipeline_mode<synchronous>, transform_indices = @transform_1, window_bounds = array<i64: 128, 256>}, {pipeline_mode = #tpu.pipeline_mode<synchronous>, transform_indices = @transform_2, window_bounds = array<i64: 1, 256>}, {pipeline_mode = #tpu.pipeline_mode<synchronous>, transform_indices = @transform_3, window_bounds = array<i64: 128, 128>}, {pipeline_mode = #tpu.pipeline_mode<synchronous>, transform_indices = @transform_4, window_bounds = array<i64: 1, 128>}, {pipeline_mode = #tpu.pipeline_mode<synchronous>, transform_indices = @transform_5, window_bounds = array<i64: 128, 128>}, {pipeline_mode = #tpu.pipeline_mode<synchronous>, transform_indices = @transform_6, window_bounds = array<i64: 1, 128>}, {transform_indices = @transform_7, window_bounds = array<i64: 8, 128>}]} {
    %c0 = arith.constant 0 : index
    %c0_0 = arith.constant 0 : index
    %0 = vector.load %arg1[%c0, %c0_0] : memref<8x128xbf16, #tpu.memory_space<vmem>>, vector<8x128xbf16>
    %c0_1 = arith.constant 0 : index
    %c0_2 = arith.constant 0 : index
    %1 = vector.load %arg2[%c0_1, %c0_2] : memref<128x256xbf16, #tpu.memory_space<vmem>>, vector<128x256xbf16>
    %cst = arith.constant dense<0.000000e+00> : vector<8x256xf32>
    %2 = tpu.matmul %0, %1, %cst {dimension_numbers = #tpu.dot_dimension_numbers<[1], [0], [0], [1], [0, 0, 1, 1], [], []>} : vector<8x128xbf16>, vector<128x256xbf16>, vector<8x256xf32> -> vector<8x256xf32>
    %c0_3 = arith.constant 0 : index
    %c0_4 = arith.constant 0 : index
    %3 = vector.load %arg3[%c0_3, %c0_4] : memref<1x256xf32, #tpu.memory_space<vmem>>, vector<1x256xf32>
    %4 = vector.broadcast %3 : vector<1x256xf32> to vector<8x256xf32>
    %5 = arith.addf %2, %4 : vector<8x256xf32>
    %cst_5 = arith.constant 0.000000e+00 : f32
    %6 = vector.broadcast %cst_5 : f32 to vector<8x256xf32>
    %7 = arith.maximumf %5, %6 : vector<8x256xf32>
    %8 = vector.extract_strided_slice %7 {offsets = [0, 0], sizes = [8, 128], strides = [1, 1]} : vector<8x256xf32> to vector<8x128xf32>
    %9 = vector.extract_strided_slice %7 {offsets = [0, 128], sizes = [8, 128], strides = [1, 1]} : vector<8x256xf32> to vector<8x128xf32>
    %10 = arith.truncf %8 : vector<8x128xf32> to vector<8x128xbf16>
    %c0_6 = arith.constant 0 : index
    %c0_7 = arith.constant 0 : index
    %11 = vector.load %arg4[%c0_6, %c0_7] : memref<128x128xbf16, #tpu.memory_space<vmem>>, vector<128x128xbf16>
    %cst_8 = arith.constant dense<0.000000e+00> : vector<8x128xf32>
    %12 = tpu.matmul %10, %11, %cst_8 {dimension_numbers = #tpu.dot_dimension_numbers<[1], [0], [0], [1], [0, 0, 1, 1], [], []>} : vector<8x128xbf16>, vector<128x128xbf16>, vector<8x128xf32> -> vector<8x128xf32>
    %c0_9 = arith.constant 0 : index
    %c0_10 = arith.constant 0 : index
    %13 = vector.load %arg5[%c0_9, %c0_10] : memref<1x128xf32, #tpu.memory_space<vmem>>, vector<1x128xf32>
    %14 = vector.broadcast %13 : vector<1x128xf32> to vector<8x128xf32>
    %15 = arith.addf %12, %14 : vector<8x128xf32>
    %cst_11 = arith.constant 0.000000e+00 : f32
    %16 = vector.broadcast %cst_11 : f32 to vector<8x128xf32>
    %17 = arith.maximumf %15, %16 : vector<8x128xf32>
    %18 = arith.addf %17, %9 : vector<8x128xf32>
    %19 = arith.truncf %18 : vector<8x128xf32> to vector<8x128xbf16>
    %c0_12 = arith.constant 0 : index
    %c0_13 = arith.constant 0 : index
    %20 = vector.load %arg6[%c0_12, %c0_13] : memref<128x128xbf16, #tpu.memory_space<vmem>>, vector<128x128xbf16>
    %cst_14 = arith.constant dense<0.000000e+00> : vector<8x128xf32>
    %21 = tpu.matmul %19, %20, %cst_14 {dimension_numbers = #tpu.dot_dimension_numbers<[1], [0], [0], [1], [0, 0, 1, 1], [], []>} : vector<8x128xbf16>, vector<128x128xbf16>, vector<8x128xf32> -> vector<8x128xf32>
    %c0_15 = arith.constant 0 : index
    %c0_16 = arith.constant 0 : index
    %22 = vector.load %arg7[%c0_15, %c0_16] : memref<1x128xf32, #tpu.memory_space<vmem>>, vector<1x128xf32>
    %23 = vector.broadcast %22 : vector<1x128xf32> to vector<8x128xf32>
    %24 = arith.addf %21, %23 : vector<8x128xf32>
    %c0_17 = arith.constant 0 : index
    %c0_18 = arith.constant 0 : index
    %25 = vector.load %arg8[%c0_17, %c0_18] : memref<8x128xf32, #tpu.memory_space<vmem>>, vector<8x128xf32>
    tpu.vector_store %arg8[%c0_17, %c0_18], %24 {strides = array<i32>} : memref<8x128xf32, #tpu.memory_space<vmem>>, vector<8x128xf32>,
    return
  }
  func.func @transform_0(%arg0: i32) -> (i32, i32) {
    %c0_i32 = arith.constant 0 : i32
    %c0_i32_0 = arith.constant 0 : i32
    return %arg0, %c0_i32 : i32, i32
  }
  func.func @transform_1(%arg0: i32) -> (i32, i32) {
    %c0_i32 = arith.constant 0 : i32
    %c0_i32_0 = arith.constant 0 : i32
    %c0_i32_1 = arith.constant 0 : i32
    return %c0_i32, %c0_i32_0 : i32, i32
  }
  func.func @transform_2(%arg0: i32) -> (i32, i32) {
    %c0_i32 = arith.constant 0 : i32
    %c0_i32_0 = arith.constant 0 : i32
    %c0_i32_1 = arith.constant 0 : i32
    return %c0_i32, %c0_i32_0 : i32, i32
  }
  func.func @transform_3(%arg0: i32) -> (i32, i32) {
    %c0_i32 = arith.constant 0 : i32
    %c0_i32_0 = arith.constant 0 : i32
    %c0_i32_1 = arith.constant 0 : i32
    return %c0_i32, %c0_i32_0 : i32, i32
  }
  func.func @transform_4(%arg0: i32) -> (i32, i32) {
    %c0_i32 = arith.constant 0 : i32
    %c0_i32_0 = arith.constant 0 : i32
    %c0_i32_1 = arith.constant 0 : i32
    return %c0_i32, %c0_i32_0 : i32, i32
  }
  func.func @transform_5(%arg0: i32) -> (i32, i32) {
    %c0_i32 = arith.constant 0 : i32
    %c0_i32_0 = arith.constant 0 : i32
    %c0_i32_1 = arith.constant 0 : i32
    return %c0_i32, %c0_i32_0 : i32, i32
  }
  func.func @transform_6(%arg0: i32) -> (i32, i32) {
    %c0_i32 = arith.constant 0 : i32
    %c0_i32_0 = arith.constant 0 : i32
    %c0_i32_1 = arith.constant 0 : i32
    return %c0_i32, %c0_i32_0 : i32, i32
  }
  func.func @transform_7(%arg0: i32) -> (i32, i32) {
    %c0_i32 = arith.constant 0 : i32
    %c0_i32_0 = arith.constant 0 : i32
    return %arg0, %c0_i32 : i32, i32
  }
}

</mosaic_0001>

<llo_original>
// kernel: speaker_recognition_forward.1
$region0: #{speaker_recognition_forward.1}
  #allocation0 [shape = 'u32[]', space=smem, size = 0x4, offset = 0x4, fixed_abs, tag = 'smem constant byte address 0x4 - core index']
  #allocation1 [shape = 'u32[144,128]{1,0:T(1,128)}', space=vmem, size = 0x12000, scoped, tag = 'internal scratch']
  %s0 = inlined_call_operand.vmem [shape: bf16[8,128], index: 0, kind: input, shape index: {}]
  %s1 = inlined_call_operand.vmem [shape: bf16[128,256], index: 1, kind: input, shape index: {}]
  %s2 = inlined_call_operand.vmem [shape: f32[1,256], index: 2, kind: input, shape index: {}]
  %s3 = inlined_call_operand.vmem [shape: bf16[128,128], index: 3, kind: input, shape index: {}]
  %s4 = inlined_call_operand.vmem [shape: f32[1,128], index: 4, kind: input, shape index: {}]
  %s5 = inlined_call_operand.vmem [shape: bf16[128,128], index: 5, kind: input, shape index: {}]
  %s6 = inlined_call_operand.vmem [shape: f32[1,128], index: 6, kind: input, shape index: {}]
  %s7 = inlined_call_operand.vmem [shape: f32[8,128], index: 7, kind: output, shape index: {}]
  %s8 = sld [smem:[#allocation0]]
  $region38: #{speaker_recognition_forward.1} parent=0
    _
  %s10 = ssub.s32 1, %s8
  %s11 = scalar_select 0, %s10, %s8
  // Predicated region
  $region2: #{speaker_recognition_forward.1} parent=0 // pred_check
    _
  $region3: #{speaker_recognition_forward.1} parent=0 // pred_check_branch
    %13 = sbr.rel (0) target = $region5
  $region4: #{speaker_recognition_forward.1} parent=0 // pred_region
    _
  $region5: #{speaker_recognition_forward.1} parent=0 // pred_fallthru
    _
  // Predicated region
  $region6: #{speaker_recognition_forward.1} parent=0 // pred_check
    _
  $region7: #{speaker_recognition_forward.1} parent=0 // pred_check_branch
    %15 = sbr.rel (0) target = $region9
  $region8: #{speaker_recognition_forward.1} parent=0 // pred_region
    _
  $region9: #{speaker_recognition_forward.1} parent=0 // pred_fallthru
    _
  // Predicated region
  $region10: #{speaker_recognition_forward.1} parent=0 // pred_check
    _
  $region11: #{speaker_recognition_forward.1} parent=0 // pred_check_branch
    %17 = sbr.rel (0) target = $region13
  $region12: #{speaker_recognition_forward.1} parent=0 // pred_region
    _
  $region13: #{speaker_recognition_forward.1} parent=0 // pred_fallthru
    _
  // Predicated region
  $region14: #{speaker_recognition_forward.1} parent=0 // pred_check
    _
  $region15: #{speaker_recognition_forward.1} parent=0 // pred_check_branch
    %19 = sbr.rel (0) target = $region17
  $region16: #{speaker_recognition_forward.1} parent=0 // pred_region
    _
  $region17: #{speaker_recognition_forward.1} parent=0 // pred_fallthru
    _
  // Predicated region
  $region18: #{speaker_recognition_forward.1} parent=0 // pred_check
    _
  $region19: #{speaker_recognition_forward.1} parent=0 // pred_check_branch
    %21 = sbr.rel (0) target = $region21
  $region20: #{speaker_recognition_forward.1} parent=0 // pred_region
    _
  $region21: #{speaker_recognition_forward.1} parent=0 // pred_fallthru
    _
  // Predicated region
  $region22: #{speaker_recognition_forward.1} parent=0 // pred_check
    _
  $region23: #{speaker_recognition_forward.1} parent=0 // pred_check_branch
    %23 = sbr.rel (0) target = $region25
  $region24: #{speaker_recognition_forward.1} parent=0 // pred_region
    _
  $region25: #{speaker_recognition_forward.1} parent=0 // pred_fallthru
    _
  // Predicated region
  $region26: #{speaker_recognition_forward.1} parent=0 // pred_check
    _
  $region27: #{speaker_recognition_forward.1} parent=0 // pred_check_branch
    %25 = sbr.rel (0) target = $region29
  $region28: #{speaker_recognition_forward.1} parent=0 // pred_region
    _
  $region29: #{speaker_recognition_forward.1} parent=0 // pred_fallthru
    _
  %v27 = vld [vmem:[%s0] sm:$0xf]
  %v28 = vld [vmem:[%s1] sm:$0xff]
  %v29 = vld [vmem:[%s1 + $0x8] sm:$0xff]
  %v30 = vld [vmem:[%s1 + $0x10] sm:$0xff]
  %v31 = vld [vmem:[%s1 + $0x18] sm:$0xff]
  %v32 = vld [vmem:[%s1 + $0x20] sm:$0xff]
  %v33 = vld [vmem:[%s1 + $0x28] sm:$0xff]
  %v34 = vld [vmem:[%s1 + $0x30] sm:$0xff]
  %v35 = vld [vmem:[%s1 + $0x38] sm:$0xff]
  %v36 = vld [vmem:[%s1 + $0x40] sm:$0xff]
  %v37 = vld [vmem:[%s1 + $0x48] sm:$0xff]
  %v38 = vld [vmem:[%s1 + $0x50] sm:$0xff]
  %v39 = vld [vmem:[%s1 + $0x58] sm:$0xff]
  %v40 = vld [vmem:[%s1 + $0x60] sm:$0xff]
  %v41 = vld [vmem:[%s1 + $0x68] sm:$0xff]
  %v42 = vld [vmem:[%s1 + $0x70] sm:$0xff]
  %v43 = vld [vmem:[%s1 + $0x78] sm:$0xff]
  %v44 = vld [vmem:[%s2] sm:$0x3]
  %v46 = vlaneseq
  %v47 = vshrl.u32 %v46, 7
  %v48 = vsub.s32 0, %v47
  %v49 = vrot.slane %v44, %v48
  %v50 = vlaneseq
  %v51 = vshrl.u32 %v50, 7
  %v52 = vsub.s32 1, %v51
  %v53 = vrot.slane %v44, %v52
  %v72 = vunpack.c.l.b16 %v28
  %v73 = vunpack.c.h.b16 %v28
  %v74 = vunpack.c.l.b16 %v29
  %v75 = vunpack.c.h.b16 %v29
  %v76 = vunpack.c.l.b16 %v30
  %v77 = vunpack.c.h.b16 %v30
  %v78 = vunpack.c.l.b16 %v31
  %v79 = vunpack.c.h.b16 %v31
  %v80 = vunpack.c.l.b16 %v32
  %v81 = vunpack.c.h.b16 %v32
  %v82 = vunpack.c.l.b16 %v33
  %v83 = vunpack.c.h.b16 %v33
  %v84 = vunpack.c.l.b16 %v34
  %v85 = vunpack.c.h.b16 %v34
  %v86 = vunpack.c.l.b16 %v35
  %v87 = vunpack.c.h.b16 %v35
  %v88 = vunpack.c.l.b16 %v36
  %v89 = vunpack.c.h.b16 %v36
  %v90 = vunpack.c.l.b16 %v37
  %v91 = vunpack.c.h.b16 %v37
  %v92 = vunpack.c.l.b16 %v38
  %v93 = vunpack.c.h.b16 %v38
  %v94 = vunpack.c.l.b16 %v39
  %v95 = vunpack.c.h.b16 %v39
  %v96 = vunpack.c.l.b16 %v40
  %v97 = vunpack.c.h.b16 %v40
  %v98 = vunpack.c.l.b16 %v41
  %v99 = vunpack.c.h.b16 %v41
  %v100 = vunpack.c.l.b16 %v42
  %v101 = vunpack.c.h.b16 %v42
  %v102 = vunpack.c.l.b16 %v43
  %v103 = vunpack.c.h.b16 %v43
  %v104 = vpack.c.b16 %v74, %v72
  %v105 = vpack.c.b16 %v75, %v73
  %v106 = vpack.c.b16 %v78, %v76
  %v107 = vpack.c.b16 %v79, %v77
  %v108 = vpack.c.b16 %v82, %v80
  %v109 = vpack.c.b16 %v83, %v81
  %v110 = vpack.c.b16 %v86, %v84
  %v111 = vpack.c.b16 %v87, %v85
  %v112 = vpack.c.b16 %v90, %v88
  %v113 = vpack.c.b16 %v91, %v89
  %v114 = vpack.c.b16 %v94, %v92
  %v115 = vpack.c.b16 %v95, %v93
  %v116 = vpack.c.b16 %v98, %v96
  %v117 = vpack.c.b16 %v99, %v97
  %v118 = vpack.c.b16 %v102, %v100
  %v119 = vpack.c.b16 %v103, %v101
  %136 = vmatprep.subr.bf16.mxu0 %v105
  %137 = vmatpush1.bf16.msra.mxu0 %v104
  %138 = vmatprep.subr.bf16.mxu0 %v107
  %139 = vmatpush1.bf16.msra.mxu0 %v106
  %140 = vmatprep.subr.bf16.mxu0 %v109
  %141 = vmatpush1.bf16.msra.mxu0 %v108
  %142 = vmatprep.subr.bf16.mxu0 %v111
  %143 = vmatpush1.bf16.msra.mxu0 %v110
  %144 = vmatprep.subr.bf16.mxu0 %v113
  %145 = vmatpush1.bf16.msra.mxu0 %v112
  %146 = vmatprep.subr.bf16.mxu0 %v115
  %147 = vmatpush1.bf16.msra.mxu0 %v114
  %148 = vmatprep.subr.bf16.mxu0 %v117
  %149 = vmatpush1.bf16.msra.mxu0 %v116
  %150 = vmatprep.subr.bf16.mxu0 %v119
  %151 = vmatpush1.bf16.msra.mxu0 %v118
  %152 = vmatprep.subr.bf16.mxu0 0
  %153 = vmatpush1.bf16.msra.mxu0 0
  %154 = vmatprep.subr.bf16.mxu0 0
  %155 = vmatpush1.bf16.msra.mxu0 0
  %156 = vmatprep.subr.bf16.mxu0 0
  %157 = vmatpush1.bf16.msra.mxu0 0
  %158 = vmatprep.subr.bf16.mxu0 0
  %159 = vmatpush1.bf16.msra.mxu0 0
  %160 = vmatprep.subr.bf16.mxu0 0
  %161 = vmatpush1.bf16.msra.mxu0 0
  %162 = vmatprep.subr.bf16.mxu0 0
  %163 = vmatpush1.bf16.msra.mxu0 0
  %164 = vmatprep.subr.bf16.mxu0 0
  %165 = vmatpush1.bf16.msra.mxu0 0
  %166 = vmatprep.subr.bf16.mxu0 0
  %167 = vmatpush1.bf16.msra.mxu0 0
  %168 = vmatprep.mubr.bf16.mxu0 0
  %169 = vmatmul.mubr.bf16.gmra.mrb[0].mxu0 %v27
  %v170 = vpop.f32.mrb[0].mxu0
  %v171 = vadd.f32 %v49, %v170
  %v172 = vpop.f32.mrb[0].mxu0
  %v173 = vadd.f32 %v53, %v172
  %v174 = vpop.f32.mrb[0].mxu0
  %v175 = vpop.f32.mrb[0].mxu0
  %176 = vdwg.mxu0
  %v177 = vmax.f32 %v171, 0.0
  %v178 = vmax.f32 %v173, 0.0
  %v179 = vpack.c.bf16 %v177, %v177
  %v180 = vld [vmem:[%s3] sm:$0xf]
  %v181 = vld [vmem:[%s3 + $0x4] sm:$0xf]
  %v182 = vld [vmem:[%s3 + $0x8] sm:$0xf]
  %v183 = vld [vmem:[%s3 + $0xc] sm:$0xf]
  %v184 = vld [vmem:[%s3 + $0x10] sm:$0xf]
  %v185 = vld [vmem:[%s3 + $0x14] sm:$0xf]
  %v186 = vld [vmem:[%s3 + $0x18] sm:$0xf]
  %v187 = vld [vmem:[%s3 + $0x1c] sm:$0xf]
  %v188 = vld [vmem:[%s3 + $0x20] sm:$0xf]
  %v189 = vld [vmem:[%s3 + $0x24] sm:$0xf]
  %v190 = vld [vmem:[%s3 + $0x28] sm:$0xf]
  %v191 = vld [vmem:[%s3 + $0x2c] sm:$0xf]
  %v192 = vld [vmem:[%s3 + $0x30] sm:$0xf]
  %v193 = vld [vmem:[%s3 + $0x34] sm:$0xf]
  %v194 = vld [vmem:[%s3 + $0x38] sm:$0xf]
  %v195 = vld [vmem:[%s3 + $0x3c] sm:$0xf]
  %v196 = vld [vmem:[%s4] sm:$0x1]
  %v198 = vlaneseq
  %v199 = vshrl.u32 %v198, 7
  %v200 = vsub.s32 0, %v199
  %v201 = vrot.slane %v196, %v200
  %v219 = vunpack.c.l.b16 %v180
  %v220 = vunpack.c.l.b16 %v181
  %v221 = vunpack.c.l.b16 %v182
  %v222 = vunpack.c.l.b16 %v183
  %v223 = vunpack.c.l.b16 %v184
  %v224 = vunpack.c.l.b16 %v185
  %v225 = vunpack.c.l.b16 %v186
  %v226 = vunpack.c.l.b16 %v187
  %v227 = vunpack.c.l.b16 %v188
  %v228 = vunpack.c.l.b16 %v189
  %v229 = vunpack.c.l.b16 %v190
  %v230 = vunpack.c.l.b16 %v191
  %v231 = vunpack.c.l.b16 %v192
  %v232 = vunpack.c.l.b16 %v193
  %v233 = vunpack.c.l.b16 %v194
  %v234 = vunpack.c.l.b16 %v195
  %v235 = vpack.c.b16 %v220, %v219
  %v236 = vpack.c.b16 %v222, %v221
  %v237 = vpack.c.b16 %v224, %v223
  %v238 = vpack.c.b16 %v226, %v225
  %v239 = vpack.c.b16 %v228, %v227
  %v240 = vpack.c.b16 %v230, %v229
  %v241 = vpack.c.b16 %v232, %v231
  %v242 = vpack.c.b16 %v234, %v233
  %251 = vmatprep.subr.bf16.mxu0 0
  %252 = vmatpush1.bf16.msra.mxu0 %v235
  %253 = vmatprep.subr.bf16.mxu0 0
  %254 = vmatpush1.bf16.msra.mxu0 %v236
  %255 = vmatprep.subr.bf16.mxu0 0
  %256 = vmatpush1.bf16.msra.mxu0 %v237
  %257 = vmatprep.subr.bf16.mxu0 0
  %258 = vmatpush1.bf16.msra.mxu0 %v238
  %259 = vmatprep.subr.bf16.mxu0 0
  %260 = vmatpush1.bf16.msra.mxu0 %v239
  %261 = vmatprep.subr.bf16.mxu0 0
  %262 = vmatpush1.bf16.msra.mxu0 %v240
  %263 = vmatprep.subr.bf16.mxu0 0
  %264 = vmatpush1.bf16.msra.mxu0 %v241
  %265 = vmatprep.subr.bf16.mxu0 0
  %266 = vmatpush1.bf16.msra.mxu0 %v242
  %267 = vmatprep.subr.bf16.mxu0 0
  %268 = vmatpush1.bf16.msra.mxu0 0
  %269 = vmatprep.subr.bf16.mxu0 0
  %270 = vmatpush1.bf16.msra.mxu0 0
  %271 = vmatprep.subr.bf16.mxu0 0
  %272 = vmatpush1.bf16.msra.mxu0 0
  %273 = vmatprep.subr.bf16.mxu0 0
  %274 = vmatpush1.bf16.msra.mxu0 0
  %275 = vmatprep.subr.bf16.mxu0 0
  %276 = vmatpush1.bf16.msra.mxu0 0
  %277 = vmatprep.subr.bf16.mxu0 0
  %278 = vmatpush1.bf16.msra.mxu0 0
  %279 = vmatprep.subr.bf16.mxu0 0
  %280 = vmatpush1.bf16.msra.mxu0 0
  %281 = vmatprep.subr.bf16.mxu0 0
  %282 = vmatpush1.bf16.msra.mxu0 0
  %283 = vmatprep.mubr.bf16.mxu0 0
  %284 = vmatmul.mubr.bf16.gmra.mrb[0].mxu0 %v179
  %v285 = vpop.f32.mrb[0].mxu0
  %v286 = vadd.f32 %v201, %v285
  %v287 = vpop.f32.mrb[0].mxu0
  %v288 = vpop.f32.mrb[0].mxu0
  %v289 = vpop.f32.mrb[0].mxu0
  %290 = vdwg.mxu0
  %v291 = vmax.f32 %v286, 0.0
  %v292 = vadd.f32 %v291, %v178
  %v293 = vpack.c.bf16 %v292, %v292
  %v294 = vld [vmem:[%s5] sm:$0xf]
  %v295 = vld [vmem:[%s5 + $0x4] sm:$0xf]
  %v296 = vld [vmem:[%s5 + $0x8] sm:$0xf]
  %v297 = vld [vmem:[%s5 + $0xc] sm:$0xf]
  %v298 = vld [vmem:[%s5 + $0x10] sm:$0xf]
  %v299 = vld [vmem:[%s5 + $0x14] sm:$0xf]
  %v300 = vld [vmem:[%s5 + $0x18] sm:$0xf]
  %v301 = vld [vmem:[%s5 + $0x1c] sm:$0xf]
  %v302 = vld [vmem:[%s5 + $0x20] sm:$0xf]
  %v303 = vld [vmem:[%s5 + $0x24] sm:$0xf]
  %v304 = vld [vmem:[%s5 + $0x28] sm:$0xf]
  %v305 = vld [vmem:[%s5 + $0x2c] sm:$0xf]
  %v306 = vld [vmem:[%s5 + $0x30] sm:$0xf]
  %v307 = vld [vmem:[%s5 + $0x34] sm:$0xf]
  %v308 = vld [vmem:[%s5 + $0x38] sm:$0xf]
  %v309 = vld [vmem:[%s5 + $0x3c] sm:$0xf]
  %v310 = vld [vmem:[%s6] sm:$0x1]
  %v312 = vlaneseq
  %v313 = vshrl.u32 %v312, 7
  %v314 = vsub.s32 0, %v313
  %v315 = vrot.slane %v310, %v314
  %v333 = vunpack.c.l.b16 %v294
  %v334 = vunpack.c.l.b16 %v295
  %v335 = vunpack.c.l.b16 %v296
  %v336 = vunpack.c.l.b16 %v297
  %v337 = vunpack.c.l.b16 %v298
  %v338 = vunpack.c.l.b16 %v299
  %v339 = vunpack.c.l.b16 %v300
  %v340 = vunpack.c.l.b16 %v301
  %v341 = vunpack.c.l.b16 %v302
  %v342 = vunpack.c.l.b16 %v303
  %v343 = vunpack.c.l.b16 %v304
  %v344 = vunpack.c.l.b16 %v305
  %v345 = vunpack.c.l.b16 %v306
  %v346 = vunpack.c.l.b16 %v307
  %v347 = vunpack.c.l.b16 %v308
  %v348 = vunpack.c.l.b16 %v309
  %v349 = vpack.c.b16 %v334, %v333
  %v350 = vpack.c.b16 %v336, %v335
  %v351 = vpack.c.b16 %v338, %v337
  %v352 = vpack.c.b16 %v340, %v339
  %v353 = vpack.c.b16 %v342, %v341
  %v354 = vpack.c.b16 %v344, %v343
  %v355 = vpack.c.b16 %v346, %v345
  %v356 = vpack.c.b16 %v348, %v347
  %365 = vmatprep.subr.bf16.mxu0 0
  %366 = vmatpush1.bf16.msra.mxu0 %v349
  %367 = vmatprep.subr.bf16.mxu0 0
  %368 = vmatpush1.bf16.msra.mxu0 %v350
  %369 = vmatprep.subr.bf16.mxu0 0
  %370 = vmatpush1.bf16.msra.mxu0 %v351
  %371 = vmatprep.subr.bf16.mxu0 0
  %372 = vmatpush1.bf16.msra.mxu0 %v352
  %373 = vmatprep.subr.bf16.mxu0 0
  %374 = vmatpush1.bf16.msra.mxu0 %v353
  %375 = vmatprep.subr.bf16.mxu0 0
  %376 = vmatpush1.bf16.msra.mxu0 %v354
  %377 = vmatprep.subr.bf16.mxu0 0
  %378 = vmatpush1.bf16.msra.mxu0 %v355
  %379 = vmatprep.subr.bf16.mxu0 0
  %380 = vmatpush1.bf16.msra.mxu0 %v356
  %381 = vmatprep.subr.bf16.mxu0 0
  %382 = vmatpush1.bf16.msra.mxu0 0
  %383 = vmatprep.subr.bf16.mxu0 0
  %384 = vmatpush1.bf16.msra.mxu0 0
  %385 = vmatprep.subr.bf16.mxu0 0
  %386 = vmatpush1.bf16.msra.mxu0 0
  %387 = vmatprep.subr.bf16.mxu0 0
  %388 = vmatpush1.bf16.msra.mxu0 0
  %389 = vmatprep.subr.bf16.mxu0 0
  %390 = vmatpush1.bf16.msra.mxu0 0
  %391 = vmatprep.subr.bf16.mxu0 0
  %392 = vmatpush1.bf16.msra.mxu0 0
  %393 = vmatprep.subr.bf16.mxu0 0
  %394 = vmatpush1.bf16.msra.mxu0 0
  %395 = vmatprep.subr.bf16.mxu0 0
  %396 = vmatpush1.bf16.msra.mxu0 0
  %397 = vmatprep.mubr.bf16.mxu0 0
  %398 = vmatmul.mubr.bf16.gmra.mrb[0].mxu0 %v293
  %v399 = vpop.f32.mrb[0].mxu0
  %v400 = vadd.f32 %v315, %v399
  %v401 = vpop.f32.mrb[0].mxu0
  %v402 = vpop.f32.mrb[0].mxu0
  %v403 = vpop.f32.mrb[0].mxu0
  %404 = vdwg.mxu0
  %405 = vst [vmem:[%s7] sm:$0xff] %v400
  // Predicated region
  $region30: #{speaker_recognition_forward.1} parent=0 // pred_check
    _
  $region31: #{speaker_recognition_forward.1} parent=0 // pred_check_branch
    %407 = sbr.rel (0) target = $region33
  $region32: #{speaker_recognition_forward.1} parent=0 // pred_region
    _
  $region33: #{speaker_recognition_forward.1} parent=0 // pred_fallthru
    _
  // Predicated region
  $region34: #{speaker_recognition_forward.1} parent=0 // pred_check
    _
  $region35: #{speaker_recognition_forward.1} parent=0 // pred_check_branch
    %409 = sbr.rel (0) target = $region37
  $region36: #{speaker_recognition_forward.1} parent=0 // pred_region
    _
  $region37: #{speaker_recognition_forward.1} parent=0 // pred_fallthru
    _

</llo_original>
